<compile_context>
chip_gen: v6e
topology: v6e:2x2x1
jax: 0.10.0
libtpu: 0.0.40
codegen_flags: <defaults>
</compile_context>

<pallas_src>
import functools
from typing import NamedTuple

import numpy as np
import jax
import jax.numpy as jnp
from jax.experimental import pallas as pl
from jax.experimental.pallas import tpu as pltpu

SIX = 6
_MIB = 1024 * 1024


# ----------------------------------------------------------------------------
# Geometry helpers (mirror ConnectLayer.__init__)
# ----------------------------------------------------------------------------
class ConnectGeometry(NamedTuple):
    input_r: int
    input_depth: int
    kernel_size: int
    stride: int
    output_r: int
    output_depth: int

    @property
    def num_patches(self):          # P
        return self.output_r ** 2

    @property
    def rows_per_patch(self):       # R
        return self.output_depth * SIX

    @property
    def live_cols(self):            # K
        return self.kernel_size ** 2 * self.input_depth

    @property
    def n_in(self):
        return self.input_r ** 2 * self.input_depth

    @property
    def n_out(self):
        return self.num_patches * self.rows_per_patch


def make_geometry(input_r, input_depth, kernel_size, stride, output_depth):
    out = (input_r - kernel_size) / stride + 1
    if not float(out).is_integer():
        raise ValueError("stride error")
    return ConnectGeometry(input_r, input_depth, kernel_size, stride,
                           int(out), output_depth)


def patch_columns(geom):
    """(P, K) int32: flattened input columns live for each output patch.

    Flattening order is (row, col, depth), matching the module's
    ij_mask.view(-1) construction (x must be flattened the same way).
    """
    idx = np.arange(geom.n_in, dtype=np.int32).reshape(
        geom.input_r, geom.input_r, geom.input_depth)
    cols = np.empty((geom.num_patches, geom.live_cols), dtype=np.int32)
    for p in range(geom.num_patches):
        i, j = divmod(p, geom.output_r)
        r0, c0 = i * geom.stride, j * geom.stride
        cols[p] = idx[r0:r0 + geom.kernel_size,
                      c0:c0 + geom.kernel_size, :].reshape(-1)
    return cols


# ----------------------------------------------------------------------------
# One-time parameter fold (runs when parameters change, NOT per forward)
# ----------------------------------------------------------------------------
def fold_connect_params(connect_w, geom, weight_dtype=jnp.bfloat16):
    """Fold the structured mask into compact per-patch log-weights.

    Returns:
      w_compact: (P, R, K) `weight_dtype` log-weights, per-row max subtracted
                 (scale-invariant under the normalization; makes exp() <= 1 so
                 it can never overflow and the denominator is always >= 1).
      cols:      (P, K) int32 live input columns per patch.
    Every compact entry is live by construction, so there is no masked entry
    and no all-zero-row NaN path.
    """
    P, R = geom.num_patches, geom.rows_per_patch
    cols = patch_columns(geom)
    w = np.asarray(connect_w, dtype=np.float32).reshape(P, R, geom.n_in)
    w_compact = np.stack([w[p][:, cols[p]] for p in range(P)], axis=0)  # (P,R,K)
    w_compact = w_compact - w_compact.max(axis=-1, keepdims=True)
    return (jnp.asarray(w_compact, dtype=weight_dtype),
            jnp.asarray(cols, dtype=jnp.int32))


# ----------------------------------------------------------------------------
# Kernel
# ----------------------------------------------------------------------------
def _connect_kernel(x_ref, w_ref, o_ref, *, ones_row, precision):
    """One tile of patches.

    x_ref: (TP, B_aug, K) f32 im2col'ed inputs; row `ones_row` of every patch
           block is all-ones (yields the normalization denominator for free).
    w_ref: (TP, R, K) log-weights (row-max already subtracted at fold time).
    o_ref: (TP, B_aug, R) normalized outputs.
    """
    # exp on the EUP; upcast to f32 first (v5e has no bf16 EUP/VPU).
    w = jnp.exp(w_ref[...].astype(jnp.float32))                       # (TP,R,K)
    # Single batched contraction over the live columns produces BOTH the
    # outputs (rows < ones_row) and rowsum(exp(w)) (the ones row): the weight
    # tile goes through the MXU exactly once.
    y = jax.lax.dot_general(
        x_ref[...], w,
        dimension_numbers=(((2,), (2,)), ((0,), (0,))),
        preferred_element_type=jnp.float32,
        precision=precision)                                          # (TP,B_aug,R)
    denom = y[:, ones_row:ones_row + 1, :]                            # (TP,1,R) >= 1
    o_ref[...] = y * pl.reciprocal(denom, approx=True)


# ----------------------------------------------------------------------------
# Generation-aware tiling
# ----------------------------------------------------------------------------
def _round_up(n, m):
    return -(-n // m) * m


def _vmem_plan():
    """(vmem_limit_bytes, working_set_budget_bytes), generation aware."""
    try:
        cap = int(getattr(pltpu.get_tpu_info(), "vmem_capacity_bytes", 0)) or None
    except Exception:
        cap = None
    if cap is None:
        cap = 64 * _MIB                       # v7x-safe fallback
    limit = min(96 * _MIB, (cap * 3) // 4)    # ~96 MiB on v5e/v6e, ~48 MiB on v7x
    budget = (limit * 3) // 4                 # headroom for the pipeline itself
    return limit, budget


def _pick_tile_p(P, R, K, B_aug, w_itemsize, vmem_budget):
    """Largest patch tile TP that (a) divides P, (b) keeps the FULL
    double-buffered working set (weights + x + out, with (8,128) vreg padding)
    within the budget, and (c) prefers an even grid-step count so v7x's two
    TensorCores get balanced 'parallel' shards."""
    lane_k = _round_up(K, 128)
    per_patch = 2 * (_round_up(R, 8) * lane_k * w_itemsize        # weight tile
                     + _round_up(B_aug, 8) * lane_k * 4           # x tile
                     + _round_up(B_aug, 8) * _round_up(R, 128) * 4)  # out tile
    cap = max(1, vmem_budget // per_patch)
    divisors = [d for d in range(1, P + 1) if P % d == 0 and d <= cap]
    if not divisors:
        divisors = [1]
    even = [d for d in divisors if (P // d) % 2 == 0]
    return max(even if even else divisors)


# ----------------------------------------------------------------------------
# Forward wrapper
# ----------------------------------------------------------------------------
def connect_layer_forward(x, w_compact, cols, geom, *, tile_p=None, precision=None):
    """ConnectLayer.forward.

    x: (B, N_in) float32, flattened in (row, col, depth) order (same layout the
       module's mask assumes).
    w_compact, cols: from fold_connect_params.
    Returns (B, N_out // SIX, SIX) float32.

    Note: at small B the kernel is HBM-bound on (already 16x-compacted) weight
    traffic; batching micro-batches so B >= 128 amortizes the weight stream
    over more MXU rows.
    """
    B, n_in = x.shape
    assert n_in == geom.n_in, (n_in, geom.n_in)
    P, R, K = w_compact.shape
    assert (P, R, K) == (geom.num_patches, geom.rows_per_patch, geom.live_cols)

    # Pad batch to a sublane multiple and fuse the denominator: row `B` of each
    # patch block is all-ones so the matmul also produces rowsum(exp(w)).
    B_aug = _round_up(B + 1, 8)

    # im2col: gather only the live x columns per patch (B is tiny, so the
    # per-patch duplication in the wrapper is cheap; the payoff is that the
    # kernel never touches dead weight columns).
    # TODO(synk): for large B, replace the wrapper im2col with in-kernel
    # strided DMA of the (ks, ks*input_depth) slab via scalar-prefetched
    # offsets instead of materializing the duplicated patches.
    x_p = jnp.transpose(x[:, cols], (1, 0, 2)).astype(jnp.float32)   # (P, B, K)
    x_aug = jnp.zeros((P, B_aug, K), jnp.float32)
    x_aug = x_aug.at[:, :B, :].set(x_p)
    x_aug = x_aug.at[:, B, :].set(1.0)

    vmem_limit, vmem_budget = _vmem_plan()
    if tile_p is None:
        tile_p = _pick_tile_p(P, R, K, B_aug, w_compact.dtype.itemsize, vmem_budget)
    assert P % tile_p == 0, (P, tile_p)
    grid = (P // tile_p,)

    kernel = functools.partial(_connect_kernel, ones_row=B, precision=precision)
    y = pl.pallas_call(
        kernel,
        out_shape=jax.ShapeDtypeStruct((P, B_aug, R), jnp.float32),
        grid_spec=pltpu.PrefetchScalarGridSpec(
            num_scalar_prefetch=0,
            grid=grid,
            in_specs=[
                # x patches and compact weights streamed / double-buffered per
                # patch tile; last two block dims equal the full array dims.
                pl.BlockSpec((tile_p, B_aug, K), lambda i: (i, 0, 0)),
                pl.BlockSpec((tile_p, R, K), lambda i: (i, 0, 0)),
            ],
            out_specs=pl.BlockSpec((tile_p, B_aug, R), lambda i: (i, 0, 0)),
        ),
        compiler_params=pltpu.CompilerParams(
            # Patch tiles are independent -> shard across v7x's two TensorCores
            # (harmless on single-TC v5e/v6e).
            dimension_semantics=("parallel",),
            vmem_limit_bytes=vmem_limit,
        ),
    )(x_aug, w_compact)

    # (P, B, R) -> (B, P*R) -> (B, -1, SIX); kept outside the kernel (a last
    # dim of SIX inside would force masked partial-lane stores).
    return jnp.transpose(y[:, :B, :], (1, 0, 2)).reshape(B, (P * R) // SIX, SIX)


# ----------------------------------------------------------------------------
# Dense-mask builder (only for the numerical reference)
# ----------------------------------------------------------------------------
def make_connect_mask(geom):
    """Dense binary mask, replicating ConnectLayer.__init__."""
    mask = np.zeros((geom.n_out, geom.n_in), dtype=np.float32)
    cols = patch_columns(geom)
    R = geom.rows_per_patch
    for p in range(geom.num_patches):
        mask[p * R:(p + 1) * R, cols[p]] = 1.0
    return mask


if __name__ == "__main__":
    # Small config consistent with the module constructor:
    #   output_r = (input_r - kernel_size) / stride + 1 must be an integer.
    geom = make_geometry(input_r=16, input_depth=1, kernel_size=4, stride=4,
                         output_depth=4)
    # -> output_r=4, P=16 patches, R=24 rows/patch, K=16 live cols,
    #    N_in=256, N_out=384.
    B = 8

    key = jax.random.PRNGKey(0)
    k_w, k_x = jax.random.split(key)
    connect_w = jax.random.normal(k_w, (geom.n_out, geom.n_in), jnp.float32) * 2.0
    x = jax.random.normal(k_x, (B, geom.n_in), jnp.float32)

    # Exact PyTorch-semantics reference in float64 with the dense mask.
    mask64 = make_connect_mask(geom).astype(np.float64)
    w64 = np.exp(np.asarray(connect_w, np.float64)) * mask64
    w64 = w64 / w64.sum(axis=-1, keepdims=True)
    y_ref = (np.asarray(x, np.float64) @ w64.T).reshape(B, -1, SIX)

    # 1) Semantics check: f32 weight storage, forced 4-step grid (exercises the
    #    pipelined multi-tile path). Tolerance covers default precision (single
    #    bf16 MXU pass, f32 accumulation) + approx reciprocal.
    w_f32, cols = fold_connect_params(connect_w, geom, weight_dtype=jnp.float32)
    y32 = jax.block_until_ready(
        connect_layer_forward(x, w_f32, cols, geom, tile_p=4))
    assert y32.shape == (B, geom.n_out // SIX, SIX)
    np.testing.assert_allclose(np.asarray(y32, np.float64), y_ref,
                               rtol=2e-2, atol=2e-2)

    # 2) Production path: bf16 weights, auto (generation-aware, even-grid) tile
    #    pick. Compared against an f64 reference built from the SAME
    #    bf16-quantized compact log-weights, isolating kernel error from the
    #    deliberate storage quantization.
    w_bf16, cols = fold_connect_params(connect_w, geom)          # bf16 default
    y_bf = jax.block_until_ready(connect_layer_forward(x, w_bf16, cols, geom))

    wq = np.asarray(w_bf16, np.float64)                          # (P, R, K)
    pq = np.exp(wq)
    pq = pq / pq.sum(axis=-1, keepdims=True)
    xp64 = np.asarray(x, np.float64)[:, np.asarray(cols)]        # (B, P, K)
    y_ref_q = np.einsum("bpk,prk->bpr", xp64, pq).reshape(B, -1, SIX)
    np.testing.assert_allclose(np.asarray(y_bf, np.float64), y_ref_q,
                               rtol=3e-2, atol=3e-2)

    print("KERNEL_OK")
</pallas_src>

<mosaic_0001>
module attributes {stable_mosaic.version = 11 : i64} {
  func.func @_connect_kernel(%arg0: i32, %arg1: memref<4x16x16xf32, #tpu.memory_space<vmem>>, %arg2: memref<4x24x16xf32, #tpu.memory_space<vmem>>, %arg3: memref<4x16x24xf32, #tpu.memory_space<vmem>>) attributes {dimension_semantics = [#tpu.dimension_semantics<parallel>], iteration_bounds = array<i64: 4>, scalar_prefetch = 0 : i64, scratch_operands = 0 : i64, tpu.core_type = #tpu.core_type<tc>, window_params = [{transform_indices = @transform_0, window_bounds = array<i64: 4, 16, 16>}, {transform_indices = @transform_1, window_bounds = array<i64: 4, 24, 16>}, {transform_indices = @transform_2, window_bounds = array<i64: 4, 16, 24>}]} {
    %c0 = arith.constant 0 : index
    %c0_0 = arith.constant 0 : index
    %c0_1 = arith.constant 0 : index
    %0 = vector.load %arg2[%c0, %c0_0, %c0_1] : memref<4x24x16xf32, #tpu.memory_space<vmem>>, vector<4x24x16xf32>
    %1 = math.exp %0 : vector<4x24x16xf32>
    %c0_2 = arith.constant 0 : index
    %c0_3 = arith.constant 0 : index
    %c0_4 = arith.constant 0 : index
    %2 = vector.load %arg1[%c0_2, %c0_3, %c0_4] : memref<4x16x16xf32, #tpu.memory_space<vmem>>, vector<4x16x16xf32>
    %cst = arith.constant dense<0.000000e+00> : vector<4x16x24xf32>
    %3 = tpu.matmul %2, %1, %cst {dimension_numbers = #tpu.dot_dimension_numbers<[2], [2], [1], [1], [0, 0, 0, 1, 1, 1], [0], [0]>} : vector<4x16x16xf32>, vector<4x24x16xf32>, vector<4x16x24xf32> -> vector<4x16x24xf32>
    %4 = vector.extract_strided_slice %3 {offsets = [0, 8, 0], sizes = [4, 1, 24], strides = [1, 1, 1]} : vector<4x16x24xf32> to vector<4x1x24xf32>
    %5 = tpu.reciprocal %4 {approx = true} : vector<4x1x24xf32> -> vector<4x1x24xf32>
    %6 = vector.broadcast %5 : vector<4x1x24xf32> to vector<4x16x24xf32>
    %7 = arith.mulf %3, %6 : vector<4x16x24xf32>
    %c0_5 = arith.constant 0 : index
    %c0_6 = arith.constant 0 : index
    %c0_7 = arith.constant 0 : index
    %8 = vector.load %arg3[%c0_5, %c0_6, %c0_7] : memref<4x16x24xf32, #tpu.memory_space<vmem>>, vector<4x16x24xf32>
    tpu.vector_store %arg3[%c0_5, %c0_6, %c0_7], %7 {strides = array<i32>} : memref<4x16x24xf32, #tpu.memory_space<vmem>>, vector<4x16x24xf32>,
    return
  }
  func.func @transform_0(%arg0: i32) -> (i32, i32, i32) {
    %c0_i32 = arith.constant 0 : i32
    %c0_i32_0 = arith.constant 0 : i32
    %c0_i32_1 = arith.constant 0 : i32
    return %arg0, %c0_i32, %c0_i32_0 : i32, i32, i32
  }
  func.func @transform_1(%arg0: i32) -> (i32, i32, i32) {
    %c0_i32 = arith.constant 0 : i32
    %c0_i32_0 = arith.constant 0 : i32
    %c0_i32_1 = arith.constant 0 : i32
    return %arg0, %c0_i32, %c0_i32_0 : i32, i32, i32
  }
  func.func @transform_2(%arg0: i32) -> (i32, i32, i32) {
    %c0_i32 = arith.constant 0 : i32
    %c0_i32_0 = arith.constant 0 : i32
    %c0_i32_1 = arith.constant 0 : i32
    return %arg0, %c0_i32, %c0_i32_0 : i32, i32, i32
  }
}

</mosaic_0001>

<llo_original>
// kernel: tpu_custom_call.1
$region0: #{tpu_custom_call.1}
  #allocation0 [shape = 'u32[]', space=smem, size = 0x4, offset = 0x4, fixed_abs, tag = 'smem constant byte address 0x4 - core index']
  #allocation1 [shape = 'u32[144,128]{1,0:T(1,128)}', space=vmem, size = 0x12000, scoped, tag = 'internal scratch']
  %s0 = inlined_call_operand.vmem [shape: f32[16,16,16], index: 0, kind: input, shape index: {}]
  %s1 = inlined_call_operand.vmem [shape: f32[16,24,16], index: 1, kind: input, shape index: {}]
  %s2 = inlined_call_operand.hbm [shape: f32[16,16,24], index: 2, kind: output, shape index: {}]
  %s3 = sld [smem:[#allocation0]]
  $region41: #{tpu_custom_call.1} parent=0
    _
  %s5 = ssub.s32 1, %s3
  %s6 = scalar_select 0, %s5, %s3
  $region1: #{tpu_custom_call.1} parent=0
    #allocation2 [shape = 'u8[65536]{0}', space=vmem, size = 0x10000, scoped, tag = 'output window, operand 0']
    #allocation3 [shape = 's32[2]{0}', space=sflag, size = 0x8, scoped, tag = 'scoped memory for tpu_custom_call.1']
    %7 = vsyncpa [#allocation3], 0
    %s8 = scalar_lea.sflag [#allocation3], 1
    %9 = vsyncpa %s8, 0
    loop: start=0, step=1, limit=6
    $region2: #{tpu_custom_call.1} parent=1 // loop_pre_header
      _
    $region3: #{tpu_custom_call.1} parent=1 // loop_header
      %s11 = sphi 0, %s15
      %p12 = scmp.ge.s32.totalorder %s11, 6
      %s21 = sphi 0, %s23
      %s24 = sphi 0, %s21
      %s25 = sphi 0, %s24
      %s41 = sphi 0, %s25
      %s47 = sphi 0, %s49
      %s50 = sphi 0, %s47
      %s51 = sphi 0, %s50
      %s67 = sphi 0, %s51
      %s73 = sphi 0, %s75
      %s76 = sphi 0, %s73
      %s77 = sphi 0, %s76
      %s93 = sphi 0, %s77
    $region4: #{tpu_custom_call.1} parent=1 // loop_header_branch
      %14 = sbr.rel (%p12) target = $region8
    $region5: #{tpu_custom_call.1} parent=1 // loop_body
      %s16 = ssub.s32 %s11, 1
      %s17 = ssub.s32 %s11, 2
      %s18 = sadd.s32 %s11, 1
      %s19 = ssub.s32 %s11, %s18
      %p20 = scmp.eq.s32.totalorder %s19, 0
      %s22 = sadd.s32 %s21, 1
      %s23 = scalar_select %p20, %s21, %s22
      %p26 = pneg %p20
      %p27 = scmp.eq.s32.totalorder %s11, 3
      %p28 = por %p26, %p27
      %p29 = scmp.ne.s32.totalorder %s21, %s24
      %p30 = scmp.eq.s32.totalorder %s11, 0
      %p31 = por %p29, %p30
      %p32 = scmp.ne.s32.totalorder %s21, %s24
      %p33 = scmp.eq.s32.totalorder %s16, 3
      %p34 = por %p32, %p33
      %p35 = scmp.ne.s32.totalorder %s24, %s25
      %p36 = scmp.eq.s32.totalorder %s16, 0
      %p37 = por %p35, %p36
      %p38 = scmp.ne.s32.totalorder %s24, %s25
      %p39 = scmp.eq.s32.totalorder %s17, 3
      %p40 = por %p38, %p39
      %p42 = scmp.ne.s32.totalorder %s25, %s41
      %p43 = scmp.eq.s32.totalorder %s17, 0
      %p44 = por %p42, %p43
      %s45 = ssub.s32 %s11, %s18
      %p46 = scmp.eq.s32.totalorder %s45, 0
      %s48 = sadd.s32 %s47, 1
      %s49 = scalar_select %p46, %s47, %s48
      %p52 = pneg %p46
      %p53 = scmp.eq.s32.totalorder %s11, 3
      %p54 = por %p52, %p53
      %p55 = scmp.ne.s32.totalorder %s47, %s50
      %p56 = scmp.eq.s32.totalorder %s11, 0
      %p57 = por %p55, %p56
      %p58 = scmp.ne.s32.totalorder %s47, %s50
      %p59 = scmp.eq.s32.totalorder %s16, 3
      %p60 = por %p58, %p59
      %p61 = scmp.ne.s32.totalorder %s50, %s51
      %p62 = scmp.eq.s32.totalorder %s16, 0
      %p63 = por %p61, %p62
      %p64 = scmp.ne.s32.totalorder %s50, %s51
      %p65 = scmp.eq.s32.totalorder %s17, 3
      %p66 = por %p64, %p65
      %p68 = scmp.ne.s32.totalorder %s51, %s67
      %p69 = scmp.eq.s32.totalorder %s17, 0
      %p70 = por %p68, %p69
      %s71 = ssub.s32 %s11, %s18
      %p72 = scmp.eq.s32.totalorder %s71, 0
      %s74 = sadd.s32 %s73, 1
      %s75 = scalar_select %p72, %s73, %s74
      %p78 = pneg %p72
      %p79 = scmp.eq.s32.totalorder %s11, 3
      %p80 = por %p78, %p79
      %p81 = scmp.ne.s32.totalorder %s73, %s76
      %p82 = scmp.eq.s32.totalorder %s11, 0
      %p83 = por %p81, %p82
      %p84 = scmp.ne.s32.totalorder %s73, %s76
      %p85 = scmp.eq.s32.totalorder %s16, 3
      %p86 = por %p84, %p85
      %p87 = scmp.ne.s32.totalorder %s76, %s77
      %p88 = scmp.eq.s32.totalorder %s16, 0
      %p89 = por %p87, %p88
      %p90 = scmp.ne.s32.totalorder %s76, %s77
      %p91 = scmp.eq.s32.totalorder %s17, 3
      %p92 = por %p90, %p91
      %p94 = scmp.ne.s32.totalorder %s77, %s93
      %p95 = scmp.eq.s32.totalorder %s17, 0
      %p96 = por %p94, %p95
      %p97 = scmp.le.s32.totalorder 1, %s11
      %p98 = scmp.lt.s32.totalorder %s11, 5
      %p99 = pnand %p97, %p98
      %p100 = pneg %p99
      // Predicated region
      $region9: #{tpu_custom_call.1} parent=5 // pred_check
        _
      $region10: #{tpu_custom_call.1} parent=5 // pred_check_branch
        %102 = sbr.rel (%p99) target = $region12
      $region11: #{tpu_custom_call.1} parent=5 // pred_region
        %s103 = ssub.s32 %s11, 1
      $region12: #{tpu_custom_call.1} parent=5 // pred_fallthru
        _
      %p104 = scmp.lt.s32.totalorder %s11, 4
      // Predicated region
      $region13: #{tpu_custom_call.1} parent=5 // pred_check
        %p105 = pneg %p104
      $region14: #{tpu_custom_call.1} parent=5 // pred_check_branch
        %107 = sbr.rel (%p105) target = $region16
      $region15: #{tpu_custom_call.1} parent=5 // pred_region
        // Predicated region
        $region17: #{tpu_custom_call.1} parent=15 // pred_check
          %p108 = pneg %p31
        $region18: #{tpu_custom_call.1} parent=15 // pred_check_branch
          %110 = sbr.rel (%p108) target = $region20
        $region19: #{tpu_custom_call.1} parent=15 // pred_region
          %s111 = smul.u32 4, %s11
          %p112 = scmp.lt.s32.totalorder %s111, 15
          %s113 = scalar_select %p112, %s111, 15
          %s114 = smul.addr %s113, 2
          %s115 = smul.addr %s114, 8
          %s116 = scalar_lea.vmem %s0, %s115
          %s117 = smul.u32 4, %s11
        $region20: #{tpu_custom_call.1} parent=15 // pred_fallthru
          _
        // Predicated region
        $region21: #{tpu_custom_call.1} parent=15 // pred_check
          %p118 = pneg %p57
        $region22: #{tpu_custom_call.1} parent=15 // pred_check_branch
          %120 = sbr.rel (%p118) target = $region24
        $region23: #{tpu_custom_call.1} parent=15 // pred_region
          %s121 = smul.u32 4, %s11
          %p122 = scmp.lt.s32.totalorder %s121, 15
          %s123 = scalar_select %p122, %s121, 15
          %s124 = smul.addr %s123, 3
          %s125 = smul.addr %s124, 8
          %s126 = scalar_lea.vmem %s1, %s125
          %s127 = smul.u32 4, %s11
        $region24: #{tpu_custom_call.1} parent=15 // pred_fallthru
          _
      $region16: #{tpu_custom_call.1} parent=5 // pred_fallthru
        _
      %p128 = scmp.le.s32.totalorder 1, %s11
      %p129 = scmp.lt.s32.totalorder %s11, 5
      %p130 = pnand %p128, %p129
      %p131 = pneg %p130
      // Predicated region
      $region25: #{tpu_custom_call.1} parent=5 // pred_check
        _
      $region26: #{tpu_custom_call.1} parent=5 // pred_check_branch
        %133 = sbr.rel (%p130) target = $region28
      $region27: #{tpu_custom_call.1} parent=5 // pred_region
        %s134 = ssub.s32 %s11, 1
        %s135 = smul.u32 4, %s16
        %p136 = scmp.lt.s32.totalorder %s135, 15
        %s137 = scalar_select %p136, %s135, 15
        %s138 = smul.addr %s137, 2
        %s139 = smul.addr %s138, 8
        %s140 = scalar_lea.vmem %s0, %s139
        %p141 = pneg %p37
        %p142 = pneg %p34
        %s143 = smul.u32 4, %s16
        %p144 = scmp.lt.s32.totalorder %s143, 15
        %s145 = scalar_select %p144, %s143, 15
        %s146 = smul.addr %s145, 3
        %s147 = smul.addr %s146, 8
        %s148 = scalar_lea.vmem %s1, %s147
        %p149 = pneg %p63
        %p150 = pneg %p60
        %p151 = pneg %p89
        %p152 = pneg %p86
        %s153 = sand.u32 %s76, 1
        %s154 = scalar_lea.sflag [#allocation3], %s153
        %s155 = sand.u32 %s76, 1
        %s156 = smul.addr %s155, 64
        %s157 = scalar_lea.vmem [#allocation2], %s156
        %s158 = smul.u32 4, %s16
        %p159 = scmp.lt.s32.totalorder %s158, 15
        %s160 = scalar_select %p159, %s158, 15
        %s161 = smul.addr %s160, 2
        %s162 = smul.addr %s161, 8
        %s163 = scalar_lea.vmem %s0, %s162
        %s164 = smul.u32 4, %s16
        %s165 = smul.u32 4, %s16
        %p166 = scmp.lt.s32.totalorder %s165, 15
        %s167 = scalar_select %p166, %s165, 15
        %s168 = smul.addr %s167, 3
        %s169 = smul.addr %s168, 8
        %s170 = scalar_lea.vmem %s1, %s169
        %s171 = smul.u32 4, %s16
        %s172 = smul.u32 4, %s16
        %v173 = vld [vmem:[%s170] sm:$0xff]
        %v174 = vld [vmem:[%s170 + $0x8] sm:$0xff]
        %v175 = vld [vmem:[%s170 + $0x10] sm:$0xff]
        %v176 = vld [vmem:[%s170 + $0x18] sm:$0xff]
        %v177 = vld [vmem:[%s170 + $0x20] sm:$0xff]
        %v178 = vld [vmem:[%s170 + $0x28] sm:$0xff]
        %v179 = vld [vmem:[%s170 + $0x30] sm:$0xff]
        %v180 = vld [vmem:[%s170 + $0x38] sm:$0xff]
        %v181 = vld [vmem:[%s170 + $0x40] sm:$0xff]
        %v182 = vld [vmem:[%s170 + $0x48] sm:$0xff]
        %v183 = vld [vmem:[%s170 + $0x50] sm:$0xff]
        %v184 = vld [vmem:[%s170 + $0x58] sm:$0xff]
        %v185 = vmul.f32 %v173, 1.442695
        %v186 = vpow.pop %v185
        %v187 = vmul.f32 %v174, 1.442695
        %v188 = vpow.pop %v187
        %v189 = vmul.f32 %v175, 1.442695
        %v190 = vpow.pop %v189
        %v191 = vmul.f32 %v176, 1.442695
        %v192 = vpow.pop %v191
        %v193 = vmul.f32 %v177, 1.442695
        %v194 = vpow.pop %v193
        %v195 = vmul.f32 %v178, 1.442695
        %v196 = vpow.pop %v195
        %v197 = vmul.f32 %v179, 1.442695
        %v198 = vpow.pop %v197
        %v199 = vmul.f32 %v180, 1.442695
        %v200 = vpow.pop %v199
        %v201 = vmul.f32 %v181, 1.442695
        %v202 = vpow.pop %v201
        %v203 = vmul.f32 %v182, 1.442695
        %v204 = vpow.pop %v203
        %v205 = vmul.f32 %v183, 1.442695
        %v206 = vpow.pop %v205
        %v207 = vmul.f32 %v184, 1.442695
        %v208 = vpow.pop %v207
        %v209 = vld [vmem:[%s163] sm:$0xff]
        %v210 = vld [vmem:[%s163 + $0x8] sm:$0xff]
        %v211 = vld [vmem:[%s163 + $0x10] sm:$0xff]
        %v212 = vld [vmem:[%s163 + $0x18] sm:$0xff]
        %v213 = vld [vmem:[%s163 + $0x20] sm:$0xff]
        %v214 = vld [vmem:[%s163 + $0x28] sm:$0xff]
        %v215 = vld [vmem:[%s163 + $0x30] sm:$0xff]
        %v216 = vld [vmem:[%s163 + $0x38] sm:$0xff]
        %vm217 = vcmask 130048
        %v219 = vsel %vm217, %v209, 0
        %v222 = vsel %vm217, %v210, 0
        %v225 = vsel %vm217, %v186, 0
        %v228 = vsel %vm217, %v188, 0
        %v231 = vsel %vm217, %v190, 0
        %233 = vmatprep.subr.mxu0 0.0
        %234 = vmatpush1.xpose.msra.mxu0 0.0
        %235 = vmatprep.subr.mxu0 0.0
        %236 = vmatpush1.xpose.msra.mxu0 0.0
        %237 = vmatprep.subr.mxu0 0.0
        %238 = vmatpush1.xpose.msra.mxu0 0.0
        %239 = vmatprep.subr.mxu0 0.0
        %240 = vmatpush1.xpose.msra.mxu0 0.0
        %241 = vmatprep.subr.mxu0 0.0
        %242 = vmatpush1.xpose.msra.mxu0 0.0
        %243 = vmatprep.subr.mxu0 0.0
        %244 = vmatpush1.xpose.msra.mxu0 0.0
        %245 = vmatprep.subr.mxu0 0.0
        %246 = vmatpush1.xpose.msra.mxu0 0.0
        %247 = vmatprep.subr.mxu0 0.0
        %248 = vmatpush1.xpose.msra.mxu0 0.0
        %249 = vmatprep.subr.mxu0 0.0
        %250 = vmatpush1.xpose.msra.mxu0 0.0
        %251 = vmatprep.subr.mxu0 0.0
        %252 = vmatpush1.xpose.msra.mxu0 0.0
        %253 = vmatprep.subr.mxu0 0.0
        %254 = vmatpush1.xpose.msra.mxu0 0.0
        %255 = vmatprep.subr.mxu0 0.0
        %256 = vmatpush1.xpose.msra.mxu0 0.0
        %257 = vmatprep.subr.mxu0 0.0
        %258 = vmatpush1.xpose.msra.mxu0 0.0
        %259 = vmatprep.subr.mxu0 0.0
        %260 = vmatpush1.xpose.msra.mxu0 %v231
        %261 = vmatprep.subr.mxu0 0.0
        %262 = vmatpush1.xpose.msra.mxu0 %v228
        %263 = vmatprep.subr.mxu0 0.0
        %264 = vmatpush1.xpose.msra.mxu0 %v225
        %265 = vmatprep.subr.mxu0 0.0
        %266 = vmatpush2.xpose.msra.mxu0 0.0
        %267 = vmatprep.subr.mxu0 0.0
        %268 = vmatpush2.xpose.msra.mxu0 0.0
        %269 = vmatprep.subr.mxu0 0.0
        %270 = vmatpush2.xpose.msra.mxu0 0.0
        %271 = vmatprep.subr.mxu0 0.0
        %272 = vmatpush2.xpose.msra.mxu0 0.0
        %273 = vmatprep.subr.mxu0 0.0
        %274 = vmatpush2.xpose.msra.mxu0 0.0
        %275 = vmatprep.subr.mxu0 0.0
        %276 = vmatpush2.xpose.msra.mxu0 0.0
        %277 = vmatprep.subr.mxu0 0.0
        %278 = vmatpush2.xpose.msra.mxu0 0.0
        %279 = vmatprep.subr.mxu0 0.0
        %280 = vmatpush2.xpose.msra.mxu0 0.0
        %281 = vmatprep.subr.mxu0 0.0
        %282 = vmatpush2.xpose.msra.mxu0 0.0
        %283 = vmatprep.subr.mxu0 0.0
        %284 = vmatpush2.xpose.msra.mxu0 0.0
        %285 = vmatprep.subr.mxu0 0.0
        %286 = vmatpush2.xpose.msra.mxu0 0.0
        %287 = vmatprep.subr.mxu0 0.0
        %288 = vmatpush2.xpose.msra.mxu0 0.0
        %289 = vmatprep.subr.mxu0 0.0
        %290 = vmatpush2.xpose.msra.mxu0 0.0
        %291 = vmatprep.subr.mxu0 0.0
        %292 = vmatpush2.xpose.msra.mxu0 0.0
        %293 = vmatprep.subr.mxu0 0.0
        %294 = vmatpush2.xpose.msra.mxu0 0.0
        %295 = vmatprep.subr.mxu0 0.0
        %296 = vmatpush2.xpose.msra.mxu0 0.0
        %297 = vmatprep.mubr.f32.mxu0 0.0
        %298 = vmatmul.mubr.f32.gmra.mxu0 %v219
        %v299 = vpop.f32.mrf.mxu0
        %v300 = vadd.f32 0.0, %v299
        %v301 = vpop.f32.mrf.mxu0
        %302 = vmatprep.mubr.f32.mxu0 0.0
        %303 = vmatmul.mubr.f32.gmra.mxu0 %v222
        %v304 = vpop.f32.mrf.mxu0
        %v305 = vadd.f32 0.0, %v304
        %v306 = vpop.f32.mrf.mxu0
        %307 = vdwg.mxu0
        %v309 = vsel %vm217, %v211, 0
        %v312 = vsel %vm217, %v212, 0
        %v315 = vsel %vm217, %v192, 0
        %v318 = vsel %vm217, %v194, 0
        %v321 = vsel %vm217, %v196, 0
        %323 = vmatprep.subr.mxu0 0.0
        %324 = vmatpush1.xpose.msra.mxu0 0.0
        %325 = vmatprep.subr.mxu0 0.0
        %326 = vmatpush1.xpose.msra.mxu0 0.0
        %327 = vmatprep.subr.mxu0 0.0
        %328 = vmatpush1.xpose.msra.mxu0 0.0
        %329 = vmatprep.subr.mxu0 0.0
        %330 = vmatpush1.xpose.msra.mxu0 0.0
        %331 = vmatprep.subr.mxu0 0.0
        %332 = vmatpush1.xpose.msra.mxu0 0.0
        %333 = vmatprep.subr.mxu0 0.0
        %334 = vmatpush1.xpose.msra.mxu0 0.0
        %335 = vmatprep.subr.mxu0 0.0
        %336 = vmatpush1.xpose.msra.mxu0 0.0
        %337 = vmatprep.subr.mxu0 0.0
        %338 = vmatpush1.xpose.msra.mxu0 0.0
        %339 = vmatprep.subr.mxu0 0.0
        %340 = vmatpush1.xpose.msra.mxu0 0.0
        %341 = vmatprep.subr.mxu0 0.0
        %342 = vmatpush1.xpose.msra.mxu0 0.0
        %343 = vmatprep.subr.mxu0 0.0
        %344 = vmatpush1.xpose.msra.mxu0 0.0
        %345 = vmatprep.subr.mxu0 0.0
        %346 = vmatpush1.xpose.msra.mxu0 0.0
        %347 = vmatprep.subr.mxu0 0.0
        %348 = vmatpush1.xpose.msra.mxu0 0.0
        %349 = vmatprep.subr.mxu0 0.0
        %350 = vmatpush1.xpose.msra.mxu0 %v321
        %351 = vmatprep.subr.mxu0 0.0
        %352 = vmatpush1.xpose.msra.mxu0 %v318
        %353 = vmatprep.subr.mxu0 0.0
        %354 = vmatpush1.xpose.msra.mxu0 %v315
        %355 = vmatprep.subr.mxu0 0.0
        %356 = vmatpush2.xpose.msra.mxu0 0.0
        %357 = vmatprep.subr.mxu0 0.0
        %358 = vmatpush2.xpose.msra.mxu0 0.0
        %359 = vmatprep.subr.mxu0 0.0
        %360 = vmatpush2.xpose.msra.mxu0 0.0
        %361 = vmatprep.subr.mxu0 0.0
        %362 = vmatpush2.xpose.msra.mxu0 0.0
        %363 = vmatprep.subr.mxu0 0.0
        %364 = vmatpush2.xpose.msra.mxu0 0.0
        %365 = vmatprep.subr.mxu0 0.0
        %366 = vmatpush2.xpose.msra.mxu0 0.0
        %367 = vmatprep.subr.mxu0 0.0
        %368 = vmatpush2.xpose.msra.mxu0 0.0
        %369 = vmatprep.subr.mxu0 0.0
        %370 = vmatpush2.xpose.msra.mxu0 0.0
        %371 = vmatprep.subr.mxu0 0.0
        %372 = vmatpush2.xpose.msra.mxu0 0.0
        %373 = vmatprep.subr.mxu0 0.0
        %374 = vmatpush2.xpose.msra.mxu0 0.0
        %375 = vmatprep.subr.mxu0 0.0
        %376 = vmatpush2.xpose.msra.mxu0 0.0
        %377 = vmatprep.subr.mxu0 0.0
        %378 = vmatpush2.xpose.msra.mxu0 0.0
        %379 = vmatprep.subr.mxu0 0.0
        %380 = vmatpush2.xpose.msra.mxu0 0.0
        %381 = vmatprep.subr.mxu0 0.0
        %382 = vmatpush2.xpose.msra.mxu0 0.0
        %383 = vmatprep.subr.mxu0 0.0
        %384 = vmatpush2.xpose.msra.mxu0 0.0
        %385 = vmatprep.subr.mxu0 0.0
        %386 = vmatpush2.xpose.msra.mxu0 0.0
        %387 = vmatprep.mubr.f32.mxu0 0.0
        %388 = vmatmul.mubr.f32.gmra.mxu0 %v309
        %v389 = vpop.f32.mrf.mxu0
        %v390 = vadd.f32 0.0, %v389
        %v391 = vpop.f32.mrf.mxu0
        %392 = vmatprep.mubr.f32.mxu0 0.0
        %393 = vmatmul.mubr.f32.gmra.mxu0 %v312
        %v394 = vpop.f32.mrf.mxu0
        %v395 = vadd.f32 0.0, %v394
        %v396 = vpop.f32.mrf.mxu0
        %397 = vdwg.mxu0
        %v399 = vsel %vm217, %v213, 0
        %v402 = vsel %vm217, %v214, 0
        %v405 = vsel %vm217, %v198, 0
        %v408 = vsel %vm217, %v200, 0
        %v411 = vsel %vm217, %v202, 0
        %413 = vmatprep.subr.mxu0 0.0
        %414 = vmatpush1.xpose.msra.mxu0 0.0
        %415 = vmatprep.subr.mxu0 0.0
        %416 = vmatpush1.xpose.msra.mxu0 0.0
        %417 = vmatprep.subr.mxu0 0.0
        %418 = vmatpush1.xpose.msra.mxu0 0.0
        %419 = vmatprep.subr.mxu0 0.0
        %420 = vmatpush1.xpose.msra.mxu0 0.0
        %421 = vmatprep.subr.mxu0 0.0
        %422 = vmatpush1.xpose.msra.mxu0 0.0
        %423 = vmatprep.subr.mxu0 0.0
        %424 = vmatpush1.xpose.msra.mxu0 0.0
        %425 = vmatprep.subr.mxu0 0.0
        %426 = vmatpush1.xpose.msra.mxu0 0.0
        %427 = vmatprep.subr.mxu0 0.0
        %428 = vmatpush1.xpose.msra.mxu0 0.0
        %429 = vmatprep.subr.mxu0 0.0
        %430 = vmatpush1.xpose.msra.mxu0 0.0
        %431 = vmatprep.subr.mxu0 0.0
        %432 = vmatpush1.xpose.msra.mxu0 0.0
        %433 = vmatprep.subr.mxu0 0.0
        %434 = vmatpush1.xpose.msra.mxu0 0.0
        %435 = vmatprep.subr.mxu0 0.0
        %436 = vmatpush1.xpose.msra.mxu0 0.0
        %437 = vmatprep.subr.mxu0 0.0
        %438 = vmatpush1.xpose.msra.mxu0 0.0
        %439 = vmatprep.subr.mxu0 0.0
        %440 = vmatpush1.xpose.msra.mxu0 %v411
        %441 = vmatprep.subr.mxu0 0.0
        %442 = vmatpush1.xpose.msra.mxu0 %v408
        %443 = vmatprep.subr.mxu0 0.0
        %444 = vmatpush1.xpose.msra.mxu0 %v405
        %445 = vmatprep.subr.mxu0 0.0
        %446 = vmatpush2.xpose.msra.mxu0 0.0
        %447 = vmatprep.subr.mxu0 0.0
        %448 = vmatpush2.xpose.msra.mxu0 0.0
        %449 = vmatprep.subr.mxu0 0.0
        %450 = vmatpush2.xpose.msra.mxu0 0.0
        %451 = vmatprep.subr.mxu0 0.0
        %452 = vmatpush2.xpose.msra.mxu0 0.0
        %453 = vmatprep.subr.mxu0 0.0
        %454 = vmatpush2.xpose.msra.mxu0 0.0
        %455 = vmatprep.subr.mxu0 0.0
        %456 = vmatpush2.xpose.msra.mxu0 0.0
        %457 = vmatprep.subr.mxu0 0.0
        %458 = vmatpush2.xpose.msra.mxu0 0.0
        %459 = vmatprep.subr.mxu0 0.0
        %460 = vmatpush2.xpose.msra.mxu0 0.0
        %461 = vmatprep.subr.mxu0 0.0
        %462 = vmatpush2.xpose.msra.mxu0 0.0
        %463 = vmatprep.subr.mxu0 0.0
        %464 = vmatpush2.xpose.msra.mxu0 0.0
        %465 = vmatprep.subr.mxu0 0.0
        %466 = vmatpush2.xpose.msra.mxu0 0.0
        %467 = vmatprep.subr.mxu0 0.0
        %468 = vmatpush2.xpose.msra.mxu0 0.0
        %469 = vmatprep.subr.mxu0 0.0
        %470 = vmatpush2.xpose.msra.mxu0 0.0
        %471 = vmatprep.subr.mxu0 0.0
        %472 = vmatpush2.xpose.msra.mxu0 0.0
        %473 = vmatprep.subr.mxu0 0.0
        %474 = vmatpush2.xpose.msra.mxu0 0.0
        %475 = vmatprep.subr.mxu0 0.0
        %476 = vmatpush2.xpose.msra.mxu0 0.0
        %477 = vmatprep.mubr.f32.mxu0 0.0
        %478 = vmatmul.mubr.f32.gmra.mxu0 %v399
        %v479 = vpop.f32.mrf.mxu0
        %v480 = vadd.f32 0.0, %v479
        %v481 = vpop.f32.mrf.mxu0
        %482 = vmatprep.mubr.f32.mxu0 0.0
        %483 = vmatmul.mubr.f32.gmra.mxu0 %v402
        %v484 = vpop.f32.mrf.mxu0
        %v485 = vadd.f32 0.0, %v484
        %v486 = vpop.f32.mrf.mxu0
        %487 = vdwg.mxu0
        %v489 = vsel %vm217, %v215, 0
        %v492 = vsel %vm217, %v216, 0
        %v495 = vsel %vm217, %v204, 0
        %v498 = vsel %vm217, %v206, 0
        %v501 = vsel %vm217, %v208, 0
        %503 = vmatprep.subr.mxu0 0.0
        %504 = vmatpush1.xpose.msra.mxu0 0.0
        %505 = vmatprep.subr.mxu0 0.0
        %506 = vmatpush1.xpose.msra.mxu0 0.0
        %507 = vmatprep.subr.mxu0 0.0
        %508 = vmatpush1.xpose.msra.mxu0 0.0
        %509 = vmatprep.subr.mxu0 0.0
        %510 = vmatpush1.xpose.msra.mxu0 0.0
        %511 = vmatprep.subr.mxu0 0.0
        %512 = vmatpush1.xpose.msra.mxu0 0.0
        %513 = vmatprep.subr.mxu0 0.0
        %514 = vmatpush1.xpose.msra.mxu0 0.0
        %515 = vmatprep.subr.mxu0 0.0
        %516 = vmatpush1.xpose.msra.mxu0 0.0
        %517 = vmatprep.subr.mxu0 0.0
        %518 = vmatpush1.xpose.msra.mxu0 0.0
        %519 = vmatprep.subr.mxu0 0.0
        %520 = vmatpush1.xpose.msra.mxu0 0.0
        %521 = vmatprep.subr.mxu0 0.0
        %522 = vmatpush1.xpose.msra.mxu0 0.0
        %523 = vmatprep.subr.mxu0 0.0
        %524 = vmatpush1.xpose.msra.mxu0 0.0
        %525 = vmatprep.subr.mxu0 0.0
        %526 = vmatpush1.xpose.msra.mxu0 0.0
        %527 = vmatprep.subr.mxu0 0.0
        %528 = vmatpush1.xpose.msra.mxu0 0.0
        %529 = vmatprep.subr.mxu0 0.0
        %530 = vmatpush1.xpose.msra.mxu0 %v501
        %531 = vmatprep.subr.mxu0 0.0
        %532 = vmatpush1.xpose.msra.mxu0 %v498
        %533 = vmatprep.subr.mxu0 0.0
        %534 = vmatpush1.xpose.msra.mxu0 %v495
        %535 = vmatprep.subr.mxu0 0.0
        %536 = vmatpush2.xpose.msra.mxu0 0.0
        %537 = vmatprep.subr.mxu0 0.0
        %538 = vmatpush2.xpose.msra.mxu0 0.0
        %539 = vmatprep.subr.mxu0 0.0
        %540 = vmatpush2.xpose.msra.mxu0 0.0
        %541 = vmatprep.subr.mxu0 0.0
        %542 = vmatpush2.xpose.msra.mxu0 0.0
        %543 = vmatprep.subr.mxu0 0.0
        %544 = vmatpush2.xpose.msra.mxu0 0.0
        %545 = vmatprep.subr.mxu0 0.0
        %546 = vmatpush2.xpose.msra.mxu0 0.0
        %547 = vmatprep.subr.mxu0 0.0
        %548 = vmatpush2.xpose.msra.mxu0 0.0
        %549 = vmatprep.subr.mxu0 0.0
        %550 = vmatpush2.xpose.msra.mxu0 0.0
        %551 = vmatprep.subr.mxu0 0.0
        %552 = vmatpush2.xpose.msra.mxu0 0.0
        %553 = vmatprep.subr.mxu0 0.0
        %554 = vmatpush2.xpose.msra.mxu0 0.0
        %555 = vmatprep.subr.mxu0 0.0
        %556 = vmatpush2.xpose.msra.mxu0 0.0
        %557 = vmatprep.subr.mxu0 0.0
        %558 = vmatpush2.xpose.msra.mxu0 0.0
        %559 = vmatprep.subr.mxu0 0.0
        %560 = vmatpush2.xpose.msra.mxu0 0.0
        %561 = vmatprep.subr.mxu0 0.0
        %562 = vmatpush2.xpose.msra.mxu0 0.0
        %563 = vmatprep.subr.mxu0 0.0
        %564 = vmatpush2.xpose.msra.mxu0 0.0
        %565 = vmatprep.subr.mxu0 0.0
        %566 = vmatpush2.xpose.msra.mxu0 0.0
        %567 = vmatprep.mubr.f32.mxu0 0.0
        %568 = vmatmul.mubr.f32.gmra.mxu0 %v489
        %v569 = vpop.f32.mrf.mxu0
        %v570 = vadd.f32 0.0, %v569
        %v571 = vpop.f32.mrf.mxu0
        %572 = vmatprep.mubr.f32.mxu0 0.0
        %573 = vmatmul.mubr.f32.gmra.mxu0 %v492
        %v574 = vpop.f32.mrf.mxu0
        %v575 = vadd.f32 0.0, %v574
        %v576 = vpop.f32.mrf.mxu0
        %577 = vdwg.mxu0
        %v578 = vrcp.pop %v305
        %v579 = vrcp.pop %v395
        %v580 = vrcp.pop %v485
        %v581 = vrcp.pop %v575
        %v582 = vlaneseq
        %v583 = vshrl.u32 %v582, 7
        %v584 = vsub.s32 0, %v583
        %v585 = vrot.slane %v578, %v584
        %v586 = vlaneseq
        %v587 = vshrl.u32 %v586, 7
        %v588 = vsub.s32 0, %v587
        %v589 = vrot.slane %v579, %v588
        %v590 = vlaneseq
        %v591 = vshrl.u32 %v590, 7
        %v592 = vsub.s32 0, %v591
        %v593 = vrot.slane %v580, %v592
        %v594 = vlaneseq
        %v595 = vshrl.u32 %v594, 7
        %v596 = vsub.s32 0, %v595
        %v597 = vrot.slane %v581, %v596
        %v598 = vmul.f32 %v300, %v585
        %v599 = vmul.f32 %v305, %v585
        %v600 = vmul.f32 %v390, %v589
        %v601 = vmul.f32 %v395, %v589
        %v602 = vmul.f32 %v480, %v593
        %v603 = vmul.f32 %v485, %v593
        %v604 = vmul.f32 %v570, %v597
        %v605 = vmul.f32 %v575, %v597
        %vm606 = vcmask 195584
        %607 = vst.msk [vmem:[%s157] sm:$0xff] %vm606, %v598
        %608 = vst.msk [vmem:[%s157 + $0x8] sm:$0xff] %vm606, %v599
        %609 = vst.msk [vmem:[%s157 + $0x10] sm:$0xff] %vm606, %v600
        %610 = vst.msk [vmem:[%s157 + $0x18] sm:$0xff] %vm606, %v601
        %611 = vst.msk [vmem:[%s157 + $0x20] sm:$0xff] %vm606, %v602
        %612 = vst.msk [vmem:[%s157 + $0x28] sm:$0xff] %vm606, %v603
        %613 = vst.msk [vmem:[%s157 + $0x30] sm:$0xff] %vm606, %v604
        %614 = vst.msk [vmem:[%s157 + $0x38] sm:$0xff] %vm606, %v605
        %s615 = sand.u32 %s76, 1
        %s616 = scalar_lea.sflag [#allocation3], %s615
        %s617 = sand.u32 %s76, 1
        %s618 = smul.addr %s617, 64
        %s619 = scalar_lea.vmem [#allocation2], %s618
        // Predicated region
        $region29: #{tpu_custom_call.1} parent=27 // pred_check
          %p620 = pneg %p86
        $region30: #{tpu_custom_call.1} parent=27 // pred_check_branch
          %622 = sbr.rel (%p620) target = $region32
        $region31: #{tpu_custom_call.1} parent=27 // pred_region
          %s623 = smul.u32 4, %s16
          %s625 = ssub.s32 1024, 1024
          %626 = vsyncadd %s616, %s625
          %s627 = smul.addr %s623, 2
          %s628 = smul.addr %s627, 128
          %s629 = scalar_lea.hbm %s2, %s628
          %s630 = sshll.u32 %s619, 4
          %s631 = int_to_ptr.vmem [resolvable:$true] %s630
          %636 = dma.vmem_to_hbm [thread:$0]  %s631, 1024, %s629, %s616, 128, 128, 8
        $region32: #{tpu_custom_call.1} parent=27 // pred_fallthru
          _
      $region28: #{tpu_custom_call.1} parent=5 // pred_fallthru
        _
      %p637 = scmp.le.s32.totalorder 2, %s11
      // Predicated region
      $region33: #{tpu_custom_call.1} parent=5 // pred_check
        %p638 = pneg %p637
      $region34: #{tpu_custom_call.1} parent=5 // pred_check_branch
        %640 = sbr.rel (%p638) target = $region36
      $region35: #{tpu_custom_call.1} parent=5 // pred_region
        %s641 = ssub.s32 %s11, 2
        // Predicated region
        $region37: #{tpu_custom_call.1} parent=35 // pred_check
          %p642 = pneg %p92
        $region38: #{tpu_custom_call.1} parent=35 // pred_check_branch
          %644 = sbr.rel (%p642) target = $region40
        $region39: #{tpu_custom_call.1} parent=35 // pred_region
          %s645 = sand.u32 %s77, 1
          %s646 = scalar_lea.sflag [#allocation3], %s645
          %s647 = sand.u32 %s77, 1
          %s648 = smul.addr %s647, 64
          %s649 = scalar_lea.vmem [#allocation2], %s648
          %650 = dma.done %s646, 1024
        $region40: #{tpu_custom_call.1} parent=35 // pred_fallthru
          _
      $region36: #{tpu_custom_call.1} parent=5 // pred_fallthru
        _
    $region6: #{tpu_custom_call.1} parent=1 // loop_footer
      %s15 = sadd.s32 1, %s11
    $region7: #{tpu_custom_call.1} parent=1 // loop_footer_branch
      %10 = sbr.rel target = $region3
    $region8: #{tpu_custom_call.1} parent=1 // loop_exit
      _
    %651 = vsyncpa [#allocation3], 1
    %s652 = scalar_lea.sflag [#allocation3], 1
    %653 = vsyncpa %s652, 1

</llo_original>
